<compile_context>
chip_gen: v7x
topology: tpu7x:2x2x1
jax: 0.10.0
libtpu: 0.0.40
codegen_flags: <defaults>
</compile_context>

<pallas_src>
import functools
import math

import numpy as np
import jax
import jax.numpy as jnp
from jax.experimental import pallas as pl
from jax.experimental.pallas import tpu as pltpu

LEAKY_SLOPE = 0.01          # torch nn.LeakyReLU default
PI = math.pi
NARROW = 8                  # lane width of node/edge/update slabs (pqc_dim=2 -> 8)


def _round_up(x, m):
    return (x + m - 1) // m * m


def _pad_and_tile(n):
    """Padded row count + row tile.
    - small n: single grid program (tile == padded rows)
    - 256 < n <= 1024: two programs (v7x megacore), tile is a multiple of 128
    - large n: 512-row tiles (>=2 programs, even count)."""
    n = max(int(n), 1)
    if n <= 256:
        p = _round_up(n, 8)
        return p, p
    if n <= 1024:
        p = _round_up(n, 256)
        return p, p // 2
    p = _round_up(n, 1024)
    return p, 512


def _tile_of(rows):
    """Recover the tile for an already-padded row count (consistent with _pad_and_tile)."""
    if rows <= 256:
        return rows
    if rows <= 1024:
        return rows // 2
    return 512


def _pad2(a, r, c):
    a = jnp.asarray(a, jnp.float32)
    return jnp.zeros((r, c), jnp.float32).at[: a.shape[0], : a.shape[1]].set(a)


# ----------------------------------------------------------------------------
# Pallas kernels
# ----------------------------------------------------------------------------
def _mlp2_kernel(x_ref, w1_ref, b1_ref, w2_ref, b2_ref, o_ref, *, post):
    """y = Linear2(leaky_relu(Linear1(x)));  optional tanh(y)*pi.  Dropout = id."""
    h = jnp.dot(x_ref[...], w1_ref[...], preferred_element_type=jnp.float32) + b1_ref[...]
    h = jnp.where(h > 0, h, LEAKY_SLOPE * h)
    y = jnp.dot(h, w2_ref[...], preferred_element_type=jnp.float32) + b2_ref[...]
    if post:
        y = jnp.tanh(y) * PI
    o_ref[...] = y


def mlp2(x, w1, b1, w2, b2, *, post):
    """x is an already-padded slab (R, K); weights pre-padded.  Padded output
    lanes stay exactly zero (zero weight columns / zero bias)."""
    R, K = x.shape
    H = w1.shape[1]
    Do = w2.shape[1]
    TM = _tile_of(R)
    return pl.pallas_call(
        functools.partial(_mlp2_kernel, post=post),
        out_shape=jax.ShapeDtypeStruct((R, Do), jnp.float32),
        grid=(R // TM,),
        in_specs=[
            pl.BlockSpec((TM, K), lambda i: (i, 0)),
            pl.BlockSpec((K, H), lambda i: (0, 0)),
            pl.BlockSpec((1, H), lambda i: (0, 0)),
            pl.BlockSpec((H, Do), lambda i: (0, 0)),
            pl.BlockSpec((1, Do), lambda i: (0, 0)),
        ],
        out_specs=pl.BlockSpec((TM, Do), lambda i: (i, 0)),
        compiler_params=pltpu.CompilerParams(dimension_semantics=("parallel",)),
    )(x, w1, b1, w2, b2)


def _hop_kernel(q_ref, cf_ref, g_ref, br_ref, bi_ref, m_ref, cw_ref,
                b1_ref, w2_ref, b2_ref, o_ref):
    """Fully fused per-hop kernel.

    q_ref : (TS, 32)  per-wire complex-factor products [p00, p10, -p01, p11] x 7
    cf_ref: (TS, 8)   center-node features (first 2 lanes live)
    g_ref : (32,1792) constant 0/1 bit-selection matrix (per-wire x/y broadcast)
    br/bi : (128,512) packed circuit unitary halves (ancilla-|0> folded in)
    m_ref : (512,128) probs marginal folded into Linear1 rows [2:6]
    cw/b1 : Linear1 center-feature path + bias; w2/b2: Linear2
    out   : delta = ((tanh(MLP)*pi) - center)/2    (TS, 8)
    """
    q = q_ref[...]                                   # (TS, 32)
    re = None
    im = None
    for j in range(7):                               # build 7-wire product state
        xy = jnp.dot(q, g_ref[:, j * 256:(j + 1) * 256],
                     preferred_element_type=jnp.float32)   # (TS, 256)
        x = xy[:, :128]
        y = xy[:, 128:]
        if j == 0:
            re, im = x, y
        else:
            re, im = re * x - im * y, re * y + im * x       # complex product

    amp = (jnp.dot(re, br_ref[...], preferred_element_type=jnp.float32)
           + jnp.dot(im, bi_ref[...], preferred_element_type=jnp.float32))  # (TS,512)
    sq = amp * amp                                   # [Re^2 | Im^2]
    cf = cf_ref[...]
    h = (jnp.dot(sq, m_ref[...], preferred_element_type=jnp.float32)
         + jnp.dot(cf, cw_ref[...], preferred_element_type=jnp.float32)
         + b1_ref[...])
    h = jnp.where(h > 0, h, LEAKY_SLOPE * h)
    upd = jnp.dot(h, w2_ref[...], preferred_element_type=jnp.float32) + b2_ref[...]
    upd = jnp.tanh(upd) * PI
    o_ref[...] = (upd - cf) * 0.5                    # delta added to 2*node later


def hop_delta(q, cf, gsel, br, bi, m, cw, b1, w2, b2):
    Sp = q.shape[0]
    TS = _tile_of(Sp)
    Hh = m.shape[1]
    return pl.pallas_call(
        _hop_kernel,
        out_shape=jax.ShapeDtypeStruct((Sp, NARROW), jnp.float32),
        grid=(Sp // TS,),
        in_specs=[
            pl.BlockSpec((TS, 32), lambda i: (i, 0)),
            pl.BlockSpec((TS, NARROW), lambda i: (i, 0)),
            pl.BlockSpec((32, 1792), lambda i: (0, 0)),
            pl.BlockSpec((128, 512), lambda i: (0, 0)),
            pl.BlockSpec((128, 512), lambda i: (0, 0)),
            pl.BlockSpec((512, Hh), lambda i: (0, 0)),
            pl.BlockSpec((NARROW, Hh), lambda i: (0, 0)),
            pl.BlockSpec((1, Hh), lambda i: (0, 0)),
            pl.BlockSpec((Hh, NARROW), lambda i: (0, 0)),
            pl.BlockSpec((1, NARROW), lambda i: (0, 0)),
        ],
        out_specs=pl.BlockSpec((TS, NARROW), lambda i: (i, 0)),
        compiler_params=pltpu.CompilerParams(dimension_semantics=("parallel",)),
    )(q, cf, gsel, br, bi, m, cw, b1, w2, b2)


def _res_ln_kernel(d_ref, x_ref, g_ref, be_ref, o_ref, *, d):
    """LayerNorm(2*x + delta) over the first d lanes of the 8-lane slab."""
    v = 2.0 * x_ref[...] + d_ref[...]
    mask = (jax.lax.broadcasted_iota(jnp.int32, v.shape, 1) < d).astype(jnp.float32)
    v = v * mask
    mu = jnp.sum(v, axis=-1, keepdims=True) * (1.0 / d)
    xc = (v - mu) * mask
    var = jnp.sum(xc * xc, axis=-1, keepdims=True) * (1.0 / d)
    o_ref[...] = xc * jax.lax.rsqrt(var + 1e-5) * g_ref[...] + be_ref[...]


def res_layer_norm(delta, x, gamma, beta, *, d):
    R = x.shape[0]
    TM = _tile_of(R)
    return pl.pallas_call(
        functools.partial(_res_ln_kernel, d=d),
        out_shape=jax.ShapeDtypeStruct((R, NARROW), jnp.float32),
        grid=(R // TM,),
        in_specs=[
            pl.BlockSpec((TM, NARROW), lambda i: (i, 0)),
            pl.BlockSpec((TM, NARROW), lambda i: (i, 0)),
            pl.BlockSpec((1, NARROW), lambda i: (0, 0)),
            pl.BlockSpec((1, NARROW), lambda i: (0, 0)),
        ],
        out_specs=pl.BlockSpec((TM, NARROW), lambda i: (i, 0)),
        compiler_params=pltpu.CompilerParams(dimension_semantics=("parallel",)),
    )(delta, x, gamma, beta)


def _pool_head_kernel(p_ref, x_ref, w1_ref, b1_ref, w2_ref, b2_ref, o_ref):
    """Fused global_mean_pool (accumulated into the grid-resident output block)
    + graph_head MLP applied on the last node tile."""
    @pl.when(pl.program_id(0) == 0)
    def _():
        o_ref[...] = jnp.zeros_like(o_ref)

    o_ref[...] += jnp.dot(p_ref[...], x_ref[...], preferred_element_type=jnp.float32)

    @pl.when(pl.program_id(0) == pl.num_programs(0) - 1)
    def _():
        pooled = o_ref[...]
        h = jnp.dot(pooled, w1_ref[...], preferred_element_type=jnp.float32) + b1_ref[...]
        h = jnp.where(h > 0, h, LEAKY_SLOPE * h)
        o_ref[...] = jnp.dot(h, w2_ref[...], preferred_element_type=jnp.float32) + b2_ref[...]


def pool_head(P, x, w1, b1, w2, b2):
    Gp, Npad = P.shape
    TK = _tile_of(Npad)
    return pl.pallas_call(
        _pool_head_kernel,
        out_shape=jax.ShapeDtypeStruct((Gp, NARROW), jnp.float32),
        grid=(Npad // TK,),
        in_specs=[
            pl.BlockSpec((Gp, TK), lambda k: (0, k)),
            pl.BlockSpec((TK, NARROW), lambda k: (k, 0)),
            pl.BlockSpec((NARROW, NARROW), lambda k: (0, 0)),
            pl.BlockSpec((1, NARROW), lambda k: (0, 0)),
            pl.BlockSpec((NARROW, NARROW), lambda k: (0, 0)),
            pl.BlockSpec((1, NARROW), lambda k: (0, 0)),
        ],
        out_specs=pl.BlockSpec((Gp, NARROW), lambda k: (0, 0)),
        compiler_params=pltpu.CompilerParams(dimension_semantics=("arbitrary",)),
    )(P, x, w1, b1, w2, b2)


# ----------------------------------------------------------------------------
# Quantum circuit (qgcn_enhance_layer) — exact 8-qubit statevector semantics.
# TODO(synk): complex64 has no Pallas/TPU dtype; the PARAM-ONLY unitary is
#             precomputed once per hop in plain JAX and applied as real MXU
#             matmuls inside the Pallas hop kernel.
# ----------------------------------------------------------------------------
def _ry(t):
    c, s = jnp.cos(t / 2), jnp.sin(t / 2)
    return jnp.stack([jnp.stack([c, -s]), jnp.stack([s, c])]).astype(jnp.complex64)


def _rz(t):
    e = jnp.exp(-1j * t / 2).astype(jnp.complex64)
    z = jnp.zeros_like(e)
    return jnp.stack([jnp.stack([e, z]), jnp.stack([z, jnp.conj(e)])])


def _rx(t):
    c = (jnp.cos(t / 2) + 0j).astype(jnp.complex64)
    s = (-1j * jnp.sin(t / 2)).astype(jnp.complex64)
    return jnp.stack([jnp.stack([c, s]), jnp.stack([s, c])])


def _rot(phi, theta, omega):
    # PennyLane Rot(phi, theta, omega) = RZ(omega) RY(theta) RZ(phi)
    return _rz(omega) @ _ry(theta) @ _rz(phi)


def _apply1(state, U, w):
    state = jnp.tensordot(U, state, axes=[[1], [w]])
    return jnp.moveaxis(state, 0, w)


def _apply_ctrl(state, U, c, t):
    U4 = jnp.zeros((2, 2, 2, 2), jnp.complex64)
    U4 = U4.at[0, :, 0, :].set(jnp.eye(2, dtype=jnp.complex64))
    U4 = U4.at[1, :, 1, :].set(U)
    state = jnp.tensordot(U4, state, axes=[[2, 3], [c, t]])
    return jnp.moveaxis(state, [0, 1], [c, t])


_XGATE = np.array([[0, 1], [1, 0]], np.complex64)

# Measurement marginal onto wires [3, 7]: outcome k = 2*bit(wire3) + bit(wire7).
_Z = np.arange(256)
_SEL = ((2 * ((_Z >> 4) & 1) + (_Z & 1))[:, None] == np.arange(4)[None, :]).astype(np.float32)
_SEL2 = np.concatenate([_SEL, _SEL], axis=0)          # (512, 4)

# Bit of wire j (0..6) in the 128-dim product-state lane index (wire 0 = MSB).
_BITS = ((np.arange(128)[None, :] >> (6 - np.arange(7)[:, None])) & 1).astype(np.float32)


def _build_gsel():
    """Constant (32, 1792) 0/1 matrix: for wire j, columns [j*256, j*256+256)
    hold [x_j | y_j] where x/y select the bit-0 or bit-1 complex factor of that
    wire per lane.  Used inside the hop kernel as a single MXU broadcast."""
    G = np.zeros((32, 7 * 256), np.float32)
    for j in range(7):
        b = _BITS[j]
        G[4 * j + 0, j * 256: j * 256 + 128] = 1.0 - b     # Re factor, bit = 0
        G[4 * j + 1, j * 256: j * 256 + 128] = b           # Re factor, bit = 1
        G[4 * j + 2, j * 256 + 128: j * 256 + 256] = 1.0 - b  # Im factor, bit = 0
        G[4 * j + 3, j * 256 + 128: j * 256 + 256] = b        # Im factor, bit = 1
    return G


_GSEL = _build_gsel()


def packed_unitary_halves(inits, update_w):
    """Input-independent circuit part as two real (128,512) matrices with
    Re128 @ Br + Im128 @ Bi = [Re(U psi) | Im(U psi)]  (ancilla-|0> folded)."""
    U = jnp.eye(256, dtype=jnp.complex64).reshape((2,) * 8 + (256,))
    for i in range(3):                                   # message_passing_pqc
        U = _apply_ctrl(U, _rx(inits[0, 0]), 4 + i, 7)   # CRX(neighbor, ancilla)
        U = _apply_ctrl(U, _ry(inits[0, 1]), i, 7)       # CRY(edge, ancilla)
        U = _apply_ctrl(U, _rz(inits[0, 2]), 4 + i, 7)   # CRZ(neighbor, ancilla)
    W = update_w[0]                                      # StronglyEntanglingLayers on [3,7]
    for l in range(W.shape[0]):
        U = _apply1(U, _rot(W[l, 0, 0], W[l, 0, 1], W[l, 0, 2]), 3)
        U = _apply1(U, _rot(W[l, 1, 0], W[l, 1, 1], W[l, 1, 2]), 7)
        U = _apply_ctrl(U, jnp.asarray(_XGATE), 3, 7)
        U = _apply_ctrl(U, jnp.asarray(_XGATE), 7, 3)
    Ut = U.reshape(256, 256).T                           # [input, output]
    Ur = jnp.real(Ut).astype(jnp.float32)[0::2, :]       # ancilla-in |0> rows
    Ui = jnp.imag(Ut).astype(jnp.float32)[0::2, :]
    Br = jnp.concatenate([Ur, Ui], axis=1)               # (128, 512)
    Bi = jnp.concatenate([-Ui, Ur], axis=1)              # (128, 512)
    return Br, Bi


# ----------------------------------------------------------------------------
# Graph bookkeeping (host side, mirrors the .numpy()/.tolist() code in torch)
# ----------------------------------------------------------------------------
# TODO(synk): star_subgraph is not provided in the reference; deterministic
#             reimplementation: one star per node with degree >= graphlet_size-1.
def star_subgraph(adj, subgraph_size):
    subs = []
    n = adj.shape[0]
    for v in range(n):
        nbrs = sorted(int(u) for u in range(n) if adj[v, u])
        if len(nbrs) >= subgraph_size - 1:
            subs.append([v] + nbrs[: subgraph_size - 1])
    return subs


# ----------------------------------------------------------------------------
# Parameter init + one-time padding / precompute
# ----------------------------------------------------------------------------
def init_params(key, node_input_dim=1, edge_input_dim=1, hidden_dim=128,
                pqc_dim=2, pqc_out=4, num_classes=2, hop_neighbor=1, sel_layers=2):
    keys = iter(jax.random.split(key, 64))

    def lin(din, dout):
        return (0.1 * jax.random.normal(next(keys), (din, dout), jnp.float32),
                0.1 * jax.random.normal(next(keys), (dout,), jnp.float32))

    def mlp(d0, d1, d2):
        w1, b1 = lin(d0, d1)
        w2, b2 = lin(d1, d2)
        return (w1, b1, w2, b2)

    return {
        "input_node": mlp(node_input_dim, hidden_dim, pqc_dim),
        "input_edge": mlp(edge_input_dim, hidden_dim, pqc_dim),
        "upd": [mlp(pqc_dim + pqc_out, hidden_dim, pqc_dim) for _ in range(hop_neighbor)],
        "norm": [(jnp.ones((pqc_dim,), jnp.float32), jnp.zeros((pqc_dim,), jnp.float32))
                 for _ in range(hop_neighbor)],
        "qconv": [(0.1 * jax.random.normal(next(keys), (1, 3), jnp.float32),
                   0.1 * jax.random.normal(next(keys), (1, sel_layers, 2, 3), jnp.float32))
                  for _ in range(hop_neighbor)],
        "graph_head": mlp(pqc_dim, num_classes, num_classes),
    }


def _pad_mlp(w1, b1, w2, b2):
    K = max(_round_up(w1.shape[0], 8), 8)
    H = max(_round_up(w1.shape[1], 8), 8)
    Do = max(_round_up(w2.shape[1], 8), 8)
    return (_pad2(w1, K, H), _pad2(jnp.reshape(b1, (1, -1)), 1, H),
            _pad2(w2, H, Do), _pad2(jnp.reshape(b2, (1, -1)), 1, Do))


def prepare_params(params, num_classes=2, pqc_dim=2):
    """One-time padding of all weights + per-hop precompute of the packed circuit
    unitary halves and the probs->Linear1 fold."""
    sel2 = jnp.asarray(_SEL2)
    pp = {
        "input_node": _pad_mlp(*params["input_node"]),
        "input_edge": _pad_mlp(*params["input_edge"]),
        "graph_head": _pad_mlp(*params["graph_head"]),
        "gsel": jnp.asarray(_GSEL),
        "num_classes": num_classes,
        "pqc_dim": pqc_dim,
        "hops": [],
    }
    for hop in range(len(params["upd"])):
        w1, b1, w2, b2 = params["upd"][hop]
        gamma, beta = params["norm"][hop]
        inits, update_w = params["qconv"][hop]
        Br, Bi = packed_unitary_halves(inits, update_w)
        Hh = _round_up(w1.shape[1], 128)
        pp["hops"].append({
            "Br": Br,                                           # (128, 512)
            "Bi": Bi,                                           # (128, 512)
            "M": _pad2(sel2 @ w1[pqc_dim:pqc_dim + 4, :], 512, Hh),  # probs @ W1[2:6]
            "CW": _pad2(w1[:pqc_dim, :], NARROW, Hh),           # center-feature path
            "b1": _pad2(jnp.reshape(b1, (1, -1)), 1, Hh),
            "W2": _pad2(w2, Hh, NARROW),
            "b2": _pad2(jnp.reshape(b2, (1, -1)), 1, NARROW),
            "gamma": _pad2(jnp.reshape(gamma, (1, -1)), 1, NARROW),
            "beta": _pad2(jnp.reshape(beta, (1, -1)), 1, NARROW),
        })
    return pp


# ----------------------------------------------------------------------------
# Forward pass
# ----------------------------------------------------------------------------
def qgnn_forward(pp, node_feat, edge_attr, edge_index, batch, graphlet_size=4):
    ei = np.asarray(edge_index).T                    # (E, 2) == edge_index.t()
    batch_np = np.asarray(batch)
    N = int(node_feat.shape[0])
    E = int(edge_attr.shape[0])
    D = pp["pqc_dim"]
    Np, _ = _pad_and_tile(N)
    Ep, _ = _pad_and_tile(E)

    # Input MLPs on narrow padded slabs; lanes >= D stay exactly zero.
    w1n, b1n, w2n, b2n = pp["input_node"]
    w1e, b1e, w2e, b2e = pp["input_edge"]
    xn = jnp.zeros((Np, w1n.shape[0]), jnp.float32).at[
        :N, : node_feat.shape[1]].set(jnp.asarray(node_feat, jnp.float32))
    xe = jnp.zeros((Ep, w1e.shape[0]), jnp.float32).at[
        :E, : edge_attr.shape[1]].set(jnp.asarray(edge_attr, jnp.float32))
    node_slab = mlp2(xn, w1n, b1n, w2n, b2n, post=True)     # (Np, 8)
    edge_slab = mlp2(xe, w1e, b1e, w2e, b2e, post=True)     # (Ep, 8)

    # Host-side graph bookkeeping (mirrors the reference's .numpy()/.tolist()).
    idx_dict = {(int(u), int(v)): i for i, (u, v) in enumerate(ei.tolist())}
    adj = np.zeros((N, N), np.int32)
    adj[ei[:, 0], ei[:, 1]] = 1
    adj[ei[:, 1], ei[:, 0]] = 1

    for hp in pp["hops"]:
        subgraphs = star_subgraph(adj, graphlet_size)
        delta = jnp.zeros((Np, NARROW), jnp.float32)
        if subgraphs:
            S = len(subgraphs)
            Sp, _ = _pad_and_tile(S)
            subs = np.zeros((Sp, graphlet_size), np.int32)
            subs[:S] = np.asarray(subgraphs, np.int32)
            eidx = np.zeros((Sp, graphlet_size - 1), np.int32)
            eidx[:S] = np.asarray([[idx_dict[(int(s[0]), int(n))] for n in s[1:]]
                                   for s in subgraphs], np.int32)
            subs_j = jnp.asarray(subs)
            eidx_j = jnp.asarray(eidx)
            centers_j = subs_j[:, 0]

            # Angle gathers hit only 8-lane rows (no 128-wide gather traffic).
            e_ang = edge_slab[eidx_j][:, :, :D]              # (Sp, 3, 2)
            n_ang = node_slab[subs_j][:, :, :D]              # (Sp, 4, 2)
            angles = jnp.concatenate([e_ang, n_ang], axis=1)  # (Sp, 7, 2) wires 0..6
            half = 0.5 * angles
            cth, sth = jnp.cos(half[..., 0]), jnp.sin(half[..., 0])
            cph, sph = jnp.cos(half[..., 1]), jnp.sin(half[..., 1])
            # Per-wire complex factors: |0>: cth*cph - i*cth*sph ; |1>: sth*cph + i*sth*sph
            q = jnp.stack([cth * cph, sth * cph, -cth * sph, sth * sph],
                          axis=-1).reshape(Sp, 28)
            q = jnp.zeros((Sp, 32), jnp.float32).at[:, :28].set(q)
            CF = node_slab[centers_j]                        # (Sp, 8)

            dlt = hop_delta(q, CF, pp["gsel"], hp["Br"], hp["Bi"], hp["M"],
                            hp["CW"], hp["b1"], hp["W2"], hp["b2"])   # (Sp, 8)
            delta = delta.at[centers_j[:S]].set(dlt[:S])
        # LN((updates + node) ) == LN(2*node + delta) with delta = (upd-center)/2
        node_slab = res_layer_norm(delta, node_slab, hp["gamma"], hp["beta"], d=D)

    # Fused global_mean_pool + graph_head.
    num_graphs = int(batch_np.max()) + 1
    Gp = _round_up(num_graphs, 8)
    batch_pad = np.full((Np,), -1, np.int32)
    batch_pad[:N] = batch_np
    onehot = (jnp.arange(Gp)[:, None] == jnp.asarray(batch_pad)[None, :]).astype(jnp.float32)
    counts = jnp.maximum(jnp.sum(onehot, axis=1, keepdims=True), 1.0)
    P = onehot / counts                                      # (Gp, Np) mean-pool matrix

    gw1, gb1, gw2, gb2 = pp["graph_head"]
    logits = pool_head(P, node_slab, gw1, gb1, gw2, gb2)     # (Gp, 8)
    return logits[:num_graphs, : pp["num_classes"]]          # single slice at the end


if __name__ == "__main__":
    key = jax.random.PRNGKey(0)
    kp, kn, ke = jax.random.split(key, 3)
    raw_params = init_params(kp)
    params = prepare_params(raw_params, num_classes=2, pqc_dim=2)

    # Two 4-node star graphs (centers 0 and 4); edges listed in both directions.
    node_feat = jax.random.normal(kn, (8, 1), jnp.float32)
    edge_list = [(0, 1), (1, 0), (0, 2), (2, 0), (0, 3), (3, 0),
                 (4, 5), (5, 4), (4, 6), (6, 4), (4, 7), (7, 4)]
    edge_index = np.array(edge_list, np.int32).T             # (2, 12)
    edge_attr = jax.random.normal(ke, (12, 1), jnp.float32)
    batch = np.array([0, 0, 0, 0, 1, 1, 1, 1], np.int32)

    out = qgnn_forward(params, node_feat, edge_attr, edge_index, batch)
    out = jax.block_until_ready(out)
    assert out.shape == (2, 2) and bool(jnp.all(jnp.isfinite(out)))
    print("KERNEL_OK")
</pallas_src>

<mosaic_0001>
module attributes {stable_mosaic.version = 11 : i64} {
  func.func @_mlp2_kernel(%arg0: i32, %arg1: memref<8x8xf32, #tpu.memory_space<vmem>>, %arg2: memref<8x128xf32, #tpu.memory_space<vmem>>, %arg3: memref<1x128xf32, #tpu.memory_space<vmem>>, %arg4: memref<128x8xf32, #tpu.memory_space<vmem>>, %arg5: memref<1x8xf32, #tpu.memory_space<vmem>>, %arg6: memref<8x8xf32, #tpu.memory_space<vmem>>) attributes {dimension_semantics = [#tpu.dimension_semantics<parallel>], iteration_bounds = array<i64: 1>, scalar_prefetch = 0 : i64, scratch_operands = 0 : i64, tpu.core_type = #tpu.core_type<tc>, window_params = [{transform_indices = @transform_0, window_bounds = array<i64: 8, 8>}, {pipeline_mode = #tpu.pipeline_mode<synchronous>, transform_indices = @transform_1, window_bounds = array<i64: 8, 128>}, {pipeline_mode = #tpu.pipeline_mode<synchronous>, transform_indices = @transform_2, window_bounds = array<i64: 1, 128>}, {pipeline_mode = #tpu.pipeline_mode<synchronous>, transform_indices = @transform_3, window_bounds = array<i64: 128, 8>}, {pipeline_mode = #tpu.pipeline_mode<synchronous>, transform_indices = @transform_4, window_bounds = array<i64: 1, 8>}, {transform_indices = @transform_5, window_bounds = array<i64: 8, 8>}]} {
    %c0 = arith.constant 0 : index
    %c0_0 = arith.constant 0 : index
    %0 = vector.load %arg1[%c0, %c0_0] : memref<8x8xf32, #tpu.memory_space<vmem>>, vector<8x8xf32>
    %c0_1 = arith.constant 0 : index
    %c0_2 = arith.constant 0 : index
    %1 = vector.load %arg2[%c0_1, %c0_2] : memref<8x128xf32, #tpu.memory_space<vmem>>, vector<8x128xf32>
    %cst = arith.constant dense<0.000000e+00> : vector<8x128xf32>
    %2 = tpu.matmul %0, %1, %cst {dimension_numbers = #tpu.dot_dimension_numbers<[1], [0], [0], [1], [0, 0, 1, 1], [], []>} : vector<8x8xf32>, vector<8x128xf32>, vector<8x128xf32> -> vector<8x128xf32>
    %c0_3 = arith.constant 0 : index
    %c0_4 = arith.constant 0 : index
    %3 = vector.load %arg3[%c0_3, %c0_4] : memref<1x128xf32, #tpu.memory_space<vmem>>, vector<1x128xf32>
    %4 = vector.broadcast %3 : vector<1x128xf32> to vector<8x128xf32>
    %5 = arith.addf %2, %4 : vector<8x128xf32>
    %cst_5 = arith.constant 0.000000e+00 : f32
    %6 = vector.broadcast %cst_5 : f32 to vector<8x128xf32>
    %7 = arith.cmpf ogt, %5, %6 : vector<8x128xf32>
    %cst_6 = arith.constant 0.00999999977 : f32
    %8 = vector.broadcast %cst_6 : f32 to vector<8x128xf32>
    %9 = arith.mulf %8, %5 : vector<8x128xf32>
    %10 = arith.select %7, %5, %9 : vector<8x128xi1>, vector<8x128xf32>
    %c0_7 = arith.constant 0 : index
    %c0_8 = arith.constant 0 : index
    %11 = vector.load %arg4[%c0_7, %c0_8] : memref<128x8xf32, #tpu.memory_space<vmem>>, vector<128x8xf32>
    %cst_9 = arith.constant dense<0.000000e+00> : vector<8x8xf32>
    %12 = tpu.matmul %10, %11, %cst_9 {dimension_numbers = #tpu.dot_dimension_numbers<[1], [0], [0], [1], [0, 0, 1, 1], [], []>} : vector<8x128xf32>, vector<128x8xf32>, vector<8x8xf32> -> vector<8x8xf32>
    %c0_10 = arith.constant 0 : index
    %c0_11 = arith.constant 0 : index
    %13 = vector.load %arg5[%c0_10, %c0_11] : memref<1x8xf32, #tpu.memory_space<vmem>>, vector<1x8xf32>
    %14 = vector.broadcast %13 : vector<1x8xf32> to vector<8x8xf32>
    %15 = arith.addf %12, %14 : vector<8x8xf32>
    %16 = math.tanh %15 : vector<8x8xf32>
    %cst_12 = arith.constant 3.14159274 : f32
    %17 = vector.broadcast %cst_12 : f32 to vector<8x8xf32>
    %18 = arith.mulf %16, %17 : vector<8x8xf32>
    %c0_13 = arith.constant 0 : index
    %c0_14 = arith.constant 0 : index
    %19 = vector.load %arg6[%c0_13, %c0_14] : memref<8x8xf32, #tpu.memory_space<vmem>>, vector<8x8xf32>
    tpu.vector_store %arg6[%c0_13, %c0_14], %18 {strides = array<i32>} : memref<8x8xf32, #tpu.memory_space<vmem>>, vector<8x8xf32>,
    return
  }
  func.func @transform_0(%arg0: i32) -> (i32, i32) {
    %c0_i32 = arith.constant 0 : i32
    %c0_i32_0 = arith.constant 0 : i32
    return %arg0, %c0_i32 : i32, i32
  }
  func.func @transform_1(%arg0: i32) -> (i32, i32) {
    %c0_i32 = arith.constant 0 : i32
    %c0_i32_0 = arith.constant 0 : i32
    %c0_i32_1 = arith.constant 0 : i32
    return %c0_i32, %c0_i32_0 : i32, i32
  }
  func.func @transform_2(%arg0: i32) -> (i32, i32) {
    %c0_i32 = arith.constant 0 : i32
    %c0_i32_0 = arith.constant 0 : i32
    %c0_i32_1 = arith.constant 0 : i32
    return %c0_i32, %c0_i32_0 : i32, i32
  }
  func.func @transform_3(%arg0: i32) -> (i32, i32) {
    %c0_i32 = arith.constant 0 : i32
    %c0_i32_0 = arith.constant 0 : i32
    %c0_i32_1 = arith.constant 0 : i32
    return %c0_i32, %c0_i32_0 : i32, i32
  }
  func.func @transform_4(%arg0: i32) -> (i32, i32) {
    %c0_i32 = arith.constant 0 : i32
    %c0_i32_0 = arith.constant 0 : i32
    %c0_i32_1 = arith.constant 0 : i32
    return %c0_i32, %c0_i32_0 : i32, i32
  }
  func.func @transform_5(%arg0: i32) -> (i32, i32) {
    %c0_i32 = arith.constant 0 : i32
    %c0_i32_0 = arith.constant 0 : i32
    return %arg0, %c0_i32 : i32, i32
  }
}

</mosaic_0001>

<llo_original>
// kernel: tpu_custom_call.1
$region0: #{tpu_custom_call.1}
  #allocation0 [shape = 'u32[]', space=smem, size = 0x4, offset = 0x4, fixed_abs, tag = 'smem constant byte address 0x4 - core index']
  #allocation1 [shape = 'u32[144,128]{1,0:T(1,128)}', space=vmem, size = 0x12000, scoped, tag = 'internal scratch']
  %s0 = inlined_call_operand.vmem [shape: f32[8,8], index: 0, kind: input, shape index: {}]
  %s1 = inlined_call_operand.vmem [shape: f32[8,128], index: 1, kind: input, shape index: {}]
  %s2 = inlined_call_operand.vmem [shape: f32[1,128], index: 2, kind: input, shape index: {}]
  %s3 = inlined_call_operand.vmem [shape: f32[128,8], index: 3, kind: input, shape index: {}]
  %s4 = inlined_call_operand.vmem [shape: f32[1,8], index: 4, kind: input, shape index: {}]
  %s5 = inlined_call_operand.hbm [shape: f32[8,8], index: 5, kind: output, shape index: {}]
  %s6 = sld [smem:[#allocation0]]
  $region30: #{tpu_custom_call.1} parent=0
    _
  %s8 = ssub.s32 1, %s6
  %s9 = scalar_select 0, %s8, %s6
  $region1: #{tpu_custom_call.1} parent=0
    #allocation2 [shape = 'u8[4096]{0}', space=vmem, size = 0x1000, scoped, tag = 'output window, operand 0, single buffered']
    #allocation3 [shape = 's32[1]{0}', space=sflag, size = 0x4, scoped, tag = 'scoped memory for tpu_custom_call.1']
    %10 = vsyncpa [#allocation3], 0
    // Predicated region
    $region2: #{tpu_custom_call.1} parent=1 // pred_check
      _
    $region3: #{tpu_custom_call.1} parent=1 // pred_check_branch
      %12 = sbr.rel (0) target = $region5
    $region4: #{tpu_custom_call.1} parent=1 // pred_region
      _
    $region5: #{tpu_custom_call.1} parent=1 // pred_fallthru
      _
    // Predicated region
    $region6: #{tpu_custom_call.1} parent=1 // pred_check
      _
    $region7: #{tpu_custom_call.1} parent=1 // pred_check_branch
      %14 = sbr.rel (0) target = $region9
    $region8: #{tpu_custom_call.1} parent=1 // pred_region
      _
    $region9: #{tpu_custom_call.1} parent=1 // pred_fallthru
      _
    // Predicated region
    $region10: #{tpu_custom_call.1} parent=1 // pred_check
      _
    $region11: #{tpu_custom_call.1} parent=1 // pred_check_branch
      %16 = sbr.rel (0) target = $region13
    $region12: #{tpu_custom_call.1} parent=1 // pred_region
      _
    $region13: #{tpu_custom_call.1} parent=1 // pred_fallthru
      _
    // Predicated region
    $region14: #{tpu_custom_call.1} parent=1 // pred_check
      _
    $region15: #{tpu_custom_call.1} parent=1 // pred_check_branch
      %18 = sbr.rel (0) target = $region17
    $region16: #{tpu_custom_call.1} parent=1 // pred_region
      _
    $region17: #{tpu_custom_call.1} parent=1 // pred_fallthru
      _
    // Predicated region
    $region18: #{tpu_custom_call.1} parent=1 // pred_check
      _
    $region19: #{tpu_custom_call.1} parent=1 // pred_check_branch
      %20 = sbr.rel (0) target = $region21
    $region20: #{tpu_custom_call.1} parent=1 // pred_region
      _
    $region21: #{tpu_custom_call.1} parent=1 // pred_fallthru
      _
    %v21 = vld [vmem:[%s0] sm:$0xff]
    %v22 = vld [vmem:[%s1] sm:$0xff]
    %v23 = vld [vmem:[%s2] sm:$0x1]
    %v25 = vlaneseq
    %v26 = vshrl.u32 %v25, 7
    %v27 = vsub.s32 0, %v26
    %v28 = vrot.slane %v23, %v27
    %vm30 = vcmask 64512
    %v32 = vsel %vm30, %v21, 0
    %34 = vmatprep.subr.mxu0 0.0
    %35 = vmatpush1.msra.mxu0 %v22
    %36 = vmatprep.subr.mxu0 0.0
    %37 = vmatpush1.msra.mxu0 0.0
    %38 = vmatprep.subr.mxu0 0.0
    %39 = vmatpush1.msra.mxu0 0.0
    %40 = vmatprep.subr.mxu0 0.0
    %41 = vmatpush1.msra.mxu0 0.0
    %42 = vmatprep.subr.mxu0 0.0
    %43 = vmatpush1.msra.mxu0 0.0
    %44 = vmatprep.subr.mxu0 0.0
    %45 = vmatpush1.msra.mxu0 0.0
    %46 = vmatprep.subr.mxu0 0.0
    %47 = vmatpush1.msra.mxu0 0.0
    %48 = vmatprep.subr.mxu0 0.0
    %49 = vmatpush1.msra.mxu0 0.0
    %50 = vmatprep.subr.mxu0 0.0
    %51 = vmatpush1.msra.mxu0 0.0
    %52 = vmatprep.subr.mxu0 0.0
    %53 = vmatpush1.msra.mxu0 0.0
    %54 = vmatprep.subr.mxu0 0.0
    %55 = vmatpush1.msra.mxu0 0.0
    %56 = vmatprep.subr.mxu0 0.0
    %57 = vmatpush1.msra.mxu0 0.0
    %58 = vmatprep.subr.mxu0 0.0
    %59 = vmatpush1.msra.mxu0 0.0
    %60 = vmatprep.subr.mxu0 0.0
    %61 = vmatpush1.msra.mxu0 0.0
    %62 = vmatprep.subr.mxu0 0.0
    %63 = vmatpush1.msra.mxu0 0.0
    %64 = vmatprep.subr.mxu0 0.0
    %65 = vmatpush1.msra.mxu0 0.0
    %66 = vmatprep.subr.mxu0 0.0
    %67 = vmatpush1.msra.mxu0 0.0
    %68 = vmatprep.subr.mxu0 0.0
    %69 = vmatpush1.msra.mxu0 0.0
    %70 = vmatprep.subr.mxu0 0.0
    %71 = vmatpush1.msra.mxu0 0.0
    %72 = vmatprep.subr.mxu0 0.0
    %73 = vmatpush1.msra.mxu0 0.0
    %74 = vmatprep.subr.mxu0 0.0
    %75 = vmatpush1.msra.mxu0 0.0
    %76 = vmatprep.subr.mxu0 0.0
    %77 = vmatpush1.msra.mxu0 0.0
    %78 = vmatprep.subr.mxu0 0.0
    %79 = vmatpush1.msra.mxu0 0.0
    %80 = vmatprep.subr.mxu0 0.0
    %81 = vmatpush1.msra.mxu0 0.0
    %82 = vmatprep.subr.mxu0 0.0
    %83 = vmatpush1.msra.mxu0 0.0
    %84 = vmatprep.subr.mxu0 0.0
    %85 = vmatpush1.msra.mxu0 0.0
    %86 = vmatprep.subr.mxu0 0.0
    %87 = vmatpush1.msra.mxu0 0.0
    %88 = vmatprep.subr.mxu0 0.0
    %89 = vmatpush1.msra.mxu0 0.0
    %90 = vmatprep.subr.mxu0 0.0
    %91 = vmatpush1.msra.mxu0 0.0
    %92 = vmatprep.subr.mxu0 0.0
    %93 = vmatpush1.msra.mxu0 0.0
    %94 = vmatprep.subr.mxu0 0.0
    %95 = vmatpush1.msra.mxu0 0.0
    %96 = vmatprep.subr.mxu0 0.0
    %97 = vmatpush1.msra.mxu0 0.0
    %98 = vmatprep.mubr.f32.mxu0 0.0
    %99 = vmatmul.mubr.f32.gmra.mrb[0].mxu0 %v32
    %v100 = vpop.f32.mrb[0].mxu0
    %v101 = vadd.f32 %v28, %v100
    %v102 = vpop.f32.mrb[0].mxu0
    %103 = vdwg.mxu0
    %vm104 = vcmp.gt.f32.partialorder %v101, 0.0
    %v105 = vmul.f32 %v101, 0.01
    %v106 = vsel %vm104, %v101, %v105
    %v107 = vld [vmem:[%s3] sm:$0xff]
    %v108 = vld [vmem:[%s3 + $0x8] sm:$0xff]
    %v109 = vld [vmem:[%s3 + $0x10] sm:$0xff]
    %v110 = vld [vmem:[%s3 + $0x18] sm:$0xff]
    %v111 = vld [vmem:[%s3 + $0x20] sm:$0xff]
    %v112 = vld [vmem:[%s3 + $0x28] sm:$0xff]
    %v113 = vld [vmem:[%s3 + $0x30] sm:$0xff]
    %v114 = vld [vmem:[%s3 + $0x38] sm:$0xff]
    %v115 = vld [vmem:[%s3 + $0x40] sm:$0xff]
    %v116 = vld [vmem:[%s3 + $0x48] sm:$0xff]
    %v117 = vld [vmem:[%s3 + $0x50] sm:$0xff]
    %v118 = vld [vmem:[%s3 + $0x58] sm:$0xff]
    %v119 = vld [vmem:[%s3 + $0x60] sm:$0xff]
    %v120 = vld [vmem:[%s3 + $0x68] sm:$0xff]
    %v121 = vld [vmem:[%s3 + $0x70] sm:$0xff]
    %v122 = vld [vmem:[%s3 + $0x78] sm:$0xff]
    %v123 = vld [vmem:[%s4] sm:$0x1]
    %v125 = vlaneseq
    %v126 = vshrl.u32 %v125, 7
    %v127 = vsub.s32 0, %v126
    %v128 = vrot.slane %v123, %v127
    %130 = vmatprep.subr.mxu0 0.0
    %131 = vmatpush1.msra.mxu0 %v107
    %132 = vmatprep.subr.mxu0 0.0
    %133 = vmatpush1.msra.mxu0 %v108
    %134 = vmatprep.subr.mxu0 0.0
    %135 = vmatpush1.msra.mxu0 %v109
    %136 = vmatprep.subr.mxu0 0.0
    %137 = vmatpush1.msra.mxu0 %v110
    %138 = vmatprep.subr.mxu0 0.0
    %139 = vmatpush1.msra.mxu0 %v111
    %140 = vmatprep.subr.mxu0 0.0
    %141 = vmatpush1.msra.mxu0 %v112
    %142 = vmatprep.subr.mxu0 0.0
    %143 = vmatpush1.msra.mxu0 %v113
    %144 = vmatprep.subr.mxu0 0.0
    %145 = vmatpush1.msra.mxu0 %v114
    %146 = vmatprep.subr.mxu0 0.0
    %147 = vmatpush1.msra.mxu0 %v115
    %148 = vmatprep.subr.mxu0 0.0
    %149 = vmatpush1.msra.mxu0 %v116
    %150 = vmatprep.subr.mxu0 0.0
    %151 = vmatpush1.msra.mxu0 %v117
    %152 = vmatprep.subr.mxu0 0.0
    %153 = vmatpush1.msra.mxu0 %v118
    %154 = vmatprep.subr.mxu0 0.0
    %155 = vmatpush1.msra.mxu0 %v119
    %156 = vmatprep.subr.mxu0 0.0
    %157 = vmatpush1.msra.mxu0 %v120
    %158 = vmatprep.subr.mxu0 0.0
    %159 = vmatpush1.msra.mxu0 %v121
    %160 = vmatprep.subr.mxu0 0.0
    %161 = vmatpush1.msra.mxu0 %v122
    %162 = vmatprep.subr.mxu0 0.0
    %163 = vmatpush1.msra.mxu0 0.0
    %164 = vmatprep.subr.mxu0 0.0
    %165 = vmatpush1.msra.mxu0 0.0
    %166 = vmatprep.subr.mxu0 0.0
    %167 = vmatpush1.msra.mxu0 0.0
    %168 = vmatprep.subr.mxu0 0.0
    %169 = vmatpush1.msra.mxu0 0.0
    %170 = vmatprep.subr.mxu0 0.0
    %171 = vmatpush1.msra.mxu0 0.0
    %172 = vmatprep.subr.mxu0 0.0
    %173 = vmatpush1.msra.mxu0 0.0
    %174 = vmatprep.subr.mxu0 0.0
    %175 = vmatpush1.msra.mxu0 0.0
    %176 = vmatprep.subr.mxu0 0.0
    %177 = vmatpush1.msra.mxu0 0.0
    %178 = vmatprep.subr.mxu0 0.0
    %179 = vmatpush1.msra.mxu0 0.0
    %180 = vmatprep.subr.mxu0 0.0
    %181 = vmatpush1.msra.mxu0 0.0
    %182 = vmatprep.subr.mxu0 0.0
    %183 = vmatpush1.msra.mxu0 0.0
    %184 = vmatprep.subr.mxu0 0.0
    %185 = vmatpush1.msra.mxu0 0.0
    %186 = vmatprep.subr.mxu0 0.0
    %187 = vmatpush1.msra.mxu0 0.0
    %188 = vmatprep.subr.mxu0 0.0
    %189 = vmatpush1.msra.mxu0 0.0
    %190 = vmatprep.subr.mxu0 0.0
    %191 = vmatpush1.msra.mxu0 0.0
    %192 = vmatprep.subr.mxu0 0.0
    %193 = vmatpush1.msra.mxu0 0.0
    %194 = vmatprep.mubr.f32.mxu0 0.0
    %195 = vmatmul.mubr.f32.gmra.mrb[0].mxu0 %v106
    %v196 = vpop.f32.mrb[0].mxu0
    %v197 = vadd.f32 %v128, %v196
    %v198 = vpop.f32.mrb[0].mxu0
    %199 = vdwg.mxu0
    %v200 = vtanh.pop %v197
    %v201 = vmul.f32 %v200, 3.1415927
    %202 = vst.msk [vmem:[#allocation2] sm:$0xff] %vm30, %v201
    // Predicated region
    $region22: #{tpu_custom_call.1} parent=1 // pred_check
      _
    $region23: #{tpu_custom_call.1} parent=1 // pred_check_branch
      %204 = sbr.rel (0) target = $region25
    $region24: #{tpu_custom_call.1} parent=1 // pred_region
      %s206 = ssub.s32 128, 128
      %207 = vsyncadd [#allocation3], %s206
      %s209 = sshll.u32 [#allocation2], 4
      %s210 = int_to_ptr.vmem [resolvable:$true] %s209
      %212 = dma.vmem_to_hbm [thread:$0]  %s210, 128, %s5, [#allocation3]
    $region25: #{tpu_custom_call.1} parent=1 // pred_fallthru
      _
    // Predicated region
    $region26: #{tpu_custom_call.1} parent=1 // pred_check
      _
    $region27: #{tpu_custom_call.1} parent=1 // pred_check_branch
      %214 = sbr.rel (0) target = $region29
    $region28: #{tpu_custom_call.1} parent=1 // pred_region
      %215 = dma.done [#allocation3], 128
    $region29: #{tpu_custom_call.1} parent=1 // pred_fallthru
      _
    %216 = vsyncpa [#allocation3], 1

</llo_original>
